<compile_context>
chip_gen: v7x
topology: tpu7x:2x2x1
jax: 0.10.0
libtpu: 0.0.40
codegen_flags: <defaults>
</compile_context>

<pallas_src>
import jax
import jax.numpy as jnp
from jax import lax
from jax.experimental import pallas as pl
from jax.experimental.pallas import tpu as pltpu


def _round_up(x: int, m: int) -> int:
    return ((x + m - 1) // m) * m


def _vmem_capacity_bytes() -> int:
    """Per-core VMEM capacity; conservative fallback if the query fails."""
    try:
        cap = getattr(pltpu.get_tpu_info(), "vmem_capacity_bytes", None)
        if cap:
            return int(cap)
    except Exception:
        pass
    return 64 << 20  # v7x per-TensorCore capacity (smallest current gen)


# ---------------------------------------------------------------------------
# Fast path: default arange position ids -> contiguous row copy of the table.
# ---------------------------------------------------------------------------
def _copy_kernel(src_ref, out_ref):
    out_ref[...] = src_ref[...]


# 4 pipeline buffers (input x2 + output x2) must stay under this; 12 MiB keeps
# the copy under v5e's 16 MiB scoped-VMEM default with headroom everywhere.
_FAST_PATH_BUF_BUDGET = 12 << 20


def _pick_row_tile(seq_length: int, emb_dim: int, itemsize: int) -> int:
    tile_s = 8
    for t in (1024, 512, 256, 128, 64, 32, 16, 8):
        if t <= seq_length and 4 * t * emb_dim * itemsize <= _FAST_PATH_BUF_BUDGET:
            tile_s = t
            break
    return tile_s


def _contiguous_rows(pe_table: jax.Array, seq_length: int) -> jax.Array:
    """pe_table[:seq_length] via a dense tiled Pallas copy (ragged-safe)."""
    max_pos, emb_dim = pe_table.shape
    itemsize = jnp.dtype(pe_table.dtype).itemsize

    if seq_length < 8:
        # Tiny corner case: a dedicated kernel is pure overhead; plain slice.
        # TODO(synk): fuse the default-path slice into the consumer entirely.
        return lax.slice_in_dim(pe_table, 0, seq_length, axis=0)

    tile_s = _pick_row_tile(seq_length, emb_dim, itemsize)
    grid = pl.cdiv(seq_length, tile_s)   # ragged last block: masked writeback
    cost = pl.CostEstimate(
        flops=0, transcendentals=0,
        bytes_accessed=2 * seq_length * emb_dim * itemsize)
    return pl.pallas_call(
        _copy_kernel,
        out_shape=jax.ShapeDtypeStruct((seq_length, emb_dim), pe_table.dtype),
        grid=(grid,),
        in_specs=[pl.BlockSpec((tile_s, emb_dim), lambda i: (i, 0))],
        out_specs=pl.BlockSpec((tile_s, emb_dim), lambda i: (i, 0)),
        compiler_params=pltpu.CompilerParams(
            dimension_semantics=("parallel",),   # v7x: 2 TCs split the copy
            vmem_limit_bytes=32 << 20),
        cost_estimate=cost,
    )(pe_table)


# ---------------------------------------------------------------------------
# General path A: table fits VMEM -> one-hot MXU gather (dense output tiles).
# ---------------------------------------------------------------------------
def _onehot_gather_kernel(ids_ref, table_ref, out_ref):
    # ids_ref:   (tile_s, 1) int32 VMEM block
    # table_ref: (max_pos, D) VMEM-resident (constant block index)
    # out_ref:   (tile_s, D) dense output tile for this grid step
    tile_s = out_ref.shape[0]
    max_pos = table_ref.shape[0]
    ids = ids_ref[...]                                            # (tile_s, 1)
    iota = lax.broadcasted_iota(jnp.int32, (tile_s, max_pos), 1)
    one_hot = (ids == iota).astype(table_ref.dtype)               # (tile_s, max_pos)
    out_ref[...] = jnp.dot(
        one_hot, table_ref[...],
        preferred_element_type=jnp.float32).astype(out_ref.dtype)


def _pick_gather_tile(n: int) -> int:
    for t in (256, 128, 64, 32, 16, 8):
        if n % t == 0:
            return t
    return n   # no 8-aligned divisor: single full-extent block


def _gather_rows_onehot(pe_table, ids, tile_s, vmem_limit):
    max_pos, emb_dim = pe_table.shape
    n = ids.shape[0]
    itemsize = jnp.dtype(pe_table.dtype).itemsize
    cost = pl.CostEstimate(
        flops=2 * n * max_pos * emb_dim, transcendentals=0,
        bytes_accessed=(max_pos * emb_dim + n * emb_dim) * itemsize + n * 4)
    ids2d = ids.reshape(n, 1)
    return pl.pallas_call(
        _onehot_gather_kernel,
        out_shape=jax.ShapeDtypeStruct((n, emb_dim), pe_table.dtype),
        grid=(n // tile_s,),
        in_specs=[
            pl.BlockSpec((tile_s, 1), lambda i: (i, 0)),
            # Constant block index -> fetched once; VMEM budget below assumes
            # two table copies to stay safe with default double-buffering.
            # TODO(synk): single-buffer via pipeline_mode=pl.Buffered(1) once
            # verified on this jax version; would halve the table footprint.
            pl.BlockSpec((max_pos, emb_dim), lambda i: (0, 0)),
        ],
        out_specs=pl.BlockSpec((tile_s, emb_dim), lambda i: (i, 0)),
        compiler_params=pltpu.CompilerParams(
            # v7x: "parallel" lets both TCs work; each keeps its own table
            # copy in its own 64 MiB VMEM (2x HBM table reads, no overcommit).
            dimension_semantics=("parallel",),
            vmem_limit_bytes=vmem_limit),
        cost_estimate=cost,
    )(ids2d, pe_table)


# ---------------------------------------------------------------------------
# General path B: huge table -> table stays in HBM, 8 overlapped row DMAs per
# grid step into a dense (8, D) output block.
# ---------------------------------------------------------------------------
_FALLBACK_ROWS = 8


def _dma_gather_kernel(ids_ref, table_hbm, out_ref, sems):
    # ids_ref:   (n_pad,) int32 in SMEM (scalar prefetch)
    # table_hbm: (max_pos, D) left in HBM (memory_space=pl.ANY)
    # out_ref:   (_FALLBACK_ROWS, D) dense VMEM output block
    # sems:      (_FALLBACK_ROWS,) DMA semaphores
    base = pl.program_id(0) * _FALLBACK_ROWS
    # Issue all row DMAs first (overlapped in flight), then wait.
    for r in range(_FALLBACK_ROWS):
        idx = ids_ref[base + r]
        pltpu.make_async_copy(table_hbm.at[pl.ds(idx, 1), :],
                              out_ref.at[pl.ds(r, 1), :],
                              sems.at[r]).start()
    for r in range(_FALLBACK_ROWS):
        pltpu.make_async_copy(table_hbm.at[pl.ds(0, 1), :],
                              out_ref.at[pl.ds(r, 1), :],
                              sems.at[r]).wait()


def _gather_rows_dma(pe_table, ids):
    max_pos, emb_dim = pe_table.shape
    itemsize = jnp.dtype(pe_table.dtype).itemsize
    ids = jnp.clip(ids.astype(jnp.int32), 0, max_pos - 1)
    n = ids.shape[0]
    n_pad = _round_up(n, _FALLBACK_ROWS)
    if n_pad != n:   # pad with id 0 (always a valid row); sliced off below
        ids = jnp.concatenate([ids, jnp.zeros((n_pad - n,), jnp.int32)], axis=0)
    cost = pl.CostEstimate(
        flops=0, transcendentals=0,
        bytes_accessed=2 * n_pad * emb_dim * itemsize + n_pad * 4)
    out = pl.pallas_call(
        _dma_gather_kernel,
        out_shape=jax.ShapeDtypeStruct((n_pad, emb_dim), pe_table.dtype),
        grid_spec=pltpu.PrefetchScalarGridSpec(
            num_scalar_prefetch=1,
            grid=(n_pad // _FALLBACK_ROWS,),
            in_specs=[pl.BlockSpec(memory_space=pl.ANY)],
            out_specs=pl.BlockSpec((_FALLBACK_ROWS, emb_dim),
                                   lambda i, ids: (i, 0)),
            scratch_shapes=[pltpu.SemaphoreType.DMA((_FALLBACK_ROWS,))]),
        compiler_params=pltpu.CompilerParams(
            dimension_semantics=("arbitrary",)),
        cost_estimate=cost,
    )(ids, pe_table)
    return out[:n] if n_pad != n else out


def _gather_rows(pe_table: jax.Array, flat_ids: jax.Array) -> jax.Array:
    """Gather rows of pe_table at flat_ids -> (n, embedding_dim)."""
    max_pos, emb_dim = pe_table.shape
    n = flat_ids.shape[0]
    itemsize = jnp.dtype(pe_table.dtype).itemsize

    # nn.Embedding raises on out-of-range ids; we clamp instead (documented
    # semantic difference) so an OOB id can never become an OOB load/DMA.
    ids = jnp.clip(flat_ids.astype(jnp.int32), 0, max_pos - 1)

    tile_s = _pick_gather_tile(n)
    table_bytes = max_pos * emb_dim * itemsize
    need = (2 * table_bytes                        # table (assume 2 buffers)
            + 2 * tile_s * emb_dim * itemsize      # double-buffered out tiles
            + 2 * tile_s * 4                       # double-buffered id tiles
            + tile_s * max_pos * 4                 # one-hot intermediate
            + (2 << 20))                           # slack
    cap = _vmem_capacity_bytes()                   # 64 MiB/TC v7x, 128 MiB v5e/v6e
    if need <= cap - (16 << 20):
        vmem_limit = int(min(cap, max(need + (4 << 20), 32 << 20)))
        return _gather_rows_onehot(pe_table, ids, tile_s, vmem_limit)
    return _gather_rows_dma(pe_table, ids)


# ---------------------------------------------------------------------------
# Module wrapper (mirrors the PyTorch API).
# ---------------------------------------------------------------------------
class LearnedPositionalEncodingPallas:
    def __init__(self, max_position_embeddings, embedding_dim, seq_length, key):
        # nn.Embedding default init ~ N(0, 1); deterministic synthetic weights.
        self.pe_weight = jax.random.normal(
            key, (max_position_embeddings, embedding_dim), dtype=jnp.float32)
        self.seq_length = seq_length
        self.embedding_dim = embedding_dim
        self.position_ids = jnp.arange(seq_length, dtype=jnp.int32)[None, :]

    def __call__(self, x, position_ids=None):
        # `x` is intentionally unused, exactly like the PyTorch forward.
        if position_ids is None:
            # Default arange ids == contiguous slice of the table.
            rows = _contiguous_rows(self.pe_weight, self.seq_length)
            return rows[None, :, :]                     # (1, S, D)
        position_ids = jnp.asarray(position_ids, jnp.int32)
        flat = position_ids.reshape(-1)
        rows = _gather_rows(self.pe_weight, flat)
        return rows.reshape(position_ids.shape + (self.embedding_dim,))


if __name__ == "__main__":
    key = jax.random.PRNGKey(0)
    k_w, k_x = jax.random.split(key)

    max_position_embeddings = 64
    embedding_dim = 128
    seq_length = 8
    batch = 2

    module = LearnedPositionalEncodingPallas(
        max_position_embeddings, embedding_dim, seq_length, k_w)

    # x is unused by the forward; built only to mirror the calling convention.
    x = jax.random.normal(k_x, (batch, seq_length, embedding_dim),
                          dtype=jnp.float32)

    # 1) Default path (position_ids=None) -> contiguous tiled copy kernel.
    out_default = jax.block_until_ready(module(x))
    ref_default = module.pe_weight[:seq_length][None, :, :]
    assert out_default.shape == (1, seq_length, embedding_dim), out_default.shape
    assert jnp.allclose(out_default, ref_default), "default path mismatch"

    # 2) Explicit (permuted) position_ids -> one-hot MXU gather kernel.
    perm_ids = jnp.array([[7, 3, 0, 1, 5, 2, 6, 4]], dtype=jnp.int32)
    out_gather = jax.block_until_ready(module(x, position_ids=perm_ids))
    ref_gather = module.pe_weight[perm_ids]
    assert out_gather.shape == (1, seq_length, embedding_dim), out_gather.shape
    assert jnp.allclose(out_gather, ref_gather), "one-hot gather mismatch"

    # 3) Ragged / batched position_ids (n = 14, not 8-aligned) -> single
    #    full-extent one-hot block.
    rag_ids = jnp.array([[0, 9, 2, 33, 4, 5, 63],
                         [7, 6, 5, 4, 3, 2, 1]], dtype=jnp.int32)
    out_rag = jax.block_until_ready(module(x, position_ids=rag_ids))
    ref_rag = module.pe_weight[rag_ids]
    assert out_rag.shape == (2, 7, embedding_dim), out_rag.shape
    assert jnp.allclose(out_rag, ref_rag), "ragged one-hot gather mismatch"

    # 4) Huge-table fallback (manual row-DMA gather), exercised directly on
    #    the small table so the code path is covered by this script.
    flat = rag_ids.reshape(-1)
    out_dma = jax.block_until_ready(_gather_rows_dma(module.pe_weight, flat))
    ref_dma = module.pe_weight[flat]
    assert out_dma.shape == (14, embedding_dim), out_dma.shape
    assert jnp.allclose(out_dma, ref_dma), "DMA-gather fallback mismatch"

    # 5) Non-8-aligned default seq_length -> cdiv grid, ragged last block.
    module12 = LearnedPositionalEncodingPallas(
        max_position_embeddings, embedding_dim, 12, k_w)
    out12 = jax.block_until_ready(module12(x))
    assert out12.shape == (1, 12, embedding_dim), out12.shape
    assert jnp.allclose(out12, module12.pe_weight[:12][None, :, :]), \
        "ragged copy mismatch"

    print("KERNEL_OK")
</pallas_src>

<mosaic_0001>
module attributes {stable_mosaic.version = 11 : i64} {
  func.func @_copy_kernel(%arg0: i32, %arg1: memref<8x128xf32, #tpu.memory_space<vmem>>, %arg2: memref<8x128xf32, #tpu.memory_space<vmem>>) attributes {dimension_semantics = [#tpu.dimension_semantics<parallel>], iteration_bounds = array<i64: 1>, scalar_prefetch = 0 : i64, scratch_operands = 0 : i64, tpu.core_type = #tpu.core_type<tc>, window_params = [{transform_indices = @transform_0, window_bounds = array<i64: 8, 128>}, {transform_indices = @transform_1, window_bounds = array<i64: 8, 128>}]} {
    %c0 = arith.constant 0 : index
    %c0_0 = arith.constant 0 : index
    %0 = vector.load %arg1[%c0, %c0_0] : memref<8x128xf32, #tpu.memory_space<vmem>>, vector<8x128xf32>
    %c0_1 = arith.constant 0 : index
    %c0_2 = arith.constant 0 : index
    %1 = vector.load %arg2[%c0_1, %c0_2] : memref<8x128xf32, #tpu.memory_space<vmem>>, vector<8x128xf32>
    tpu.vector_store %arg2[%c0_1, %c0_2], %0 {strides = array<i32>} : memref<8x128xf32, #tpu.memory_space<vmem>>, vector<8x128xf32>,
    return
  }
  func.func @transform_0(%arg0: i32) -> (i32, i32) {
    %c0_i32 = arith.constant 0 : i32
    %c0_i32_0 = arith.constant 0 : i32
    return %arg0, %c0_i32 : i32, i32
  }
  func.func @transform_1(%arg0: i32) -> (i32, i32) {
    %c0_i32 = arith.constant 0 : i32
    %c0_i32_0 = arith.constant 0 : i32
    return %arg0, %c0_i32 : i32, i32
  }
}

</mosaic_0001>

<llo_original>
// kernel: tpu_custom_call.1
$region0: #{tpu_custom_call.1}
  #allocation0 [shape = 'u32[]', space=smem, size = 0x4, offset = 0x4, fixed_abs, tag = 'smem constant byte address 0x4 - core index']
  #allocation1 [shape = 'u32[144,128]{1,0:T(1,128)}', space=vmem, size = 0x12000, scoped, tag = 'internal scratch']
  %s0 = inlined_call_operand.hbm [shape: f32[64,128], index: 0, kind: input, shape index: {}]
  %s1 = inlined_call_operand.hbm [shape: f32[8,128], index: 1, kind: output, shape index: {}]
  %s2 = sld [smem:[#allocation0]]
  $region18: #{tpu_custom_call.1} parent=0
    _
  %s4 = ssub.s32 1, %s2
  %s5 = scalar_select 0, %s4, %s2
  $region1: #{tpu_custom_call.1} parent=0
    #allocation2 [shape = 'u8[4096]{0}', space=vmem, size = 0x1000, scoped, tag = 'input window, operand 0, single buffered']
    #allocation3 [shape = 's32[1]{0}', space=sflag, size = 0x4, scoped, tag = 'scoped memory for tpu_custom_call.1']
    #allocation4 [shape = 's32[1]{0}', space=sflag, size = 0x4, scoped, tag = 'scoped memory for tpu_custom_call.1']
    #allocation5 [shape = 'u8[4096]{0}', space=vmem, size = 0x1000, scoped, tag = 'output window, operand 0, single buffered']
    %6 = vsyncpa [#allocation3], 0
    %7 = vsyncpa [#allocation4], 0
    // Predicated region
    $region2: #{tpu_custom_call.1} parent=1 // pred_check
      _
    $region3: #{tpu_custom_call.1} parent=1 // pred_check_branch
      %9 = sbr.rel (0) target = $region5
    $region4: #{tpu_custom_call.1} parent=1 // pred_region
      %s11 = ssub.s32 128, 128
      %12 = vsyncadd [#allocation3], %s11
      %s14 = sshll.u32 [#allocation2], 4
      %s15 = int_to_ptr.vmem [resolvable:$true] %s14
      %17 = dma.hbm_to_vmem [thread:$0]  %s0, 128, %s15, [#allocation3]
    $region5: #{tpu_custom_call.1} parent=1 // pred_fallthru
      _
    // Predicated region
    $region6: #{tpu_custom_call.1} parent=1 // pred_check
      _
    $region7: #{tpu_custom_call.1} parent=1 // pred_check_branch
      %19 = sbr.rel (0) target = $region9
    $region8: #{tpu_custom_call.1} parent=1 // pred_region
      %20 = dma.done [#allocation3], 128
    $region9: #{tpu_custom_call.1} parent=1 // pred_fallthru
      _
    %v21 = vld [vmem:[#allocation2] sm:$0xff]
    %22 = vst [vmem:[#allocation5] sm:$0xff] %v21
    // Predicated region
    $region10: #{tpu_custom_call.1} parent=1 // pred_check
      _
    $region11: #{tpu_custom_call.1} parent=1 // pred_check_branch
      %24 = sbr.rel (0) target = $region13
    $region12: #{tpu_custom_call.1} parent=1 // pred_region
      %s26 = ssub.s32 128, 128
      %27 = vsyncadd [#allocation4], %s26
      %s29 = sshll.u32 [#allocation5], 4
      %s30 = int_to_ptr.vmem [resolvable:$true] %s29
      %32 = dma.vmem_to_hbm [thread:$0]  %s30, 128, %s1, [#allocation4]
    $region13: #{tpu_custom_call.1} parent=1 // pred_fallthru
      _
    // Predicated region
    $region14: #{tpu_custom_call.1} parent=1 // pred_check
      _
    $region15: #{tpu_custom_call.1} parent=1 // pred_check_branch
      %34 = sbr.rel (0) target = $region17
    $region16: #{tpu_custom_call.1} parent=1 // pred_region
      %35 = dma.done [#allocation4], 128
    $region17: #{tpu_custom_call.1} parent=1 // pred_fallthru
      _
    %36 = vsyncpa [#allocation3], 1
    %37 = vsyncpa [#allocation4], 1

</llo_original>
